<compile_context>
chip_gen: v7x
topology: tpu7x:2x2x1
jax: 0.10.0
libtpu: 0.0.40
codegen_flags: <defaults>
</compile_context>

<pallas_src>
import jax
import jax.numpy as jnp
from jax import lax
from jax.experimental import pallas as pl
from jax.experimental.pallas import tpu as pltpu


_F32_TEMPS_PER_PIXEL = 10        # absdx, absdy, d, d_dx, d_dy, w_x, w_y, sx, sy, slack


def _vmem_limit_bytes():
    """Scoped-VMEM request: 3/4 of physical capacity, capped at 96 MiB."""
    cap = 64 << 20                                  # conservative (v7x physical)
    try:
        info = pltpu.get_tpu_info()
        cap = int(getattr(info, "vmem_capacity_bytes", cap))
    except Exception:
        pass
    return int(min(cap * 3 // 4, 96 << 20))


def _choose_tile_h(h, w, c, img_itemsize, disp_itemsize, budget_bytes):
    """Largest multiple-of-8 TH whose total per-step working set fits budget."""
    h8 = max(8, -(-h // 8) * 8)
    per_row = 2 * w * (c * img_itemsize + disp_itemsize)       # double-buffered inputs
    per_row += _F32_TEMPS_PER_PIXEL * w * 4                    # live f32 temporaries
    fixed = (2 * 8 * w + (c + 1) * w) * 4 + 2 * 128 * 4        # accs + carries + out
    th = (budget_bytes - fixed) // max(per_row, 1)
    th = int(th // 8) * 8
    return int(min(max(th, 8), h8))


def _make_kernel(c, th, w, true_h, nh_per, single_tile, bf16_diffs):
    inv_c = 1.0 / c

    def kernel(disp_ref, img_ref, out_ref, *scratch):
        s = pl.program_id(0)
        hi = pl.program_id(2)

        d = disp_ref[0, 0].astype(jnp.float32)                     # (TH, W)

        # ---- edge-aware |dI| accumulators (channel mean = sum * 1/C) ----------
        absdx = jnp.zeros((th, w), jnp.float32)
        absdy = jnp.zeros((th, w), jnp.float32)
        for ci in range(c):                                         # C is small (3-4)
            if bf16_diffs:
                ic = img_ref[0, ci]                                 # bf16 VALU diffs
                absdx = absdx + jnp.abs(ic - pltpu.roll(ic, w - 1, 1)).astype(jnp.float32)
                absdy = absdy + jnp.abs(ic - pltpu.roll(ic, th - 1, 0)).astype(jnp.float32)
            else:
                ic = img_ref[0, ci].astype(jnp.float32)
                absdx = absdx + jnp.abs(ic - pltpu.roll(ic, w - 1, 1))
                absdy = absdy + jnp.abs(ic - pltpu.roll(ic, th - 1, 0))

        # ---- inverse-depth finite differences (1/max_disp applied in glue) ----
        d_dx = d - pltpu.roll(d, w - 1, 1)
        d_dy = d - pltpu.roll(d, th - 1, 0)

        # Multiplicative wrap / validity masks from tiny iotas (no (TH,W) iota).
        col = lax.broadcasted_iota(jnp.int32, (1, w), 1)
        colmask = (col < (w - 1)).astype(jnp.float32)               # (1, W)
        local_row = lax.broadcasted_iota(jnp.int32, (th, 1), 0)
        grow = (s * nh_per + hi) * th + local_row                   # global row index
        rowmask_y = jnp.logical_and(local_row < th - 1,
                                    grow < true_h - 1).astype(jnp.float32)  # (TH, 1)
        # NOTE: padded disparity rows are zero, so sx in padded rows is exactly 0
        # and needs no extra row mask.

        w_x = jnp.exp(absdx * (-inv_c)) * colmask
        w_y = jnp.exp(absdy * (-inv_c)) * rowmask_y
        sx = jnp.abs(d_dx) * w_x
        sy = jnp.abs(d_dy) * w_y

        lane = lax.broadcasted_iota(jnp.int32, (1, 128), 1)

        if single_tile:
            # nh_per == 1: no accumulator / carry scratch, reduce + store now.
            sum_x = jnp.sum(sx)
            sum_y = jnp.sum(sy)
            out_ref[...] = (jnp.where(lane == 0, sum_x, 0.0)
                            + jnp.where(lane == 1, sum_y, 0.0))[None]
            return

        accx_ref, accy_ref, prevd_ref, previmg_ref = scratch

        @pl.when(hi == 0)
        def _init():
            accx_ref[...] = jnp.zeros_like(accx_ref)
            accy_ref[...] = jnp.zeros_like(accy_ref)

        # Fold (TH, W) -> (8, W) with pure VPU adds; cross-lane reduce deferred.
        accx_ref[...] += jnp.sum(sx.reshape(th // 8, 8, w), axis=0)
        accy_ref[...] += jnp.sum(sy.reshape(th // 8, 8, w), axis=0)

        @pl.when(hi > 0)
        def _tile_boundary():
            # dy term for the row pair straddling the H-tile boundary.
            absb = jnp.zeros((1, w), jnp.float32)
            for ci in range(c):
                top = img_ref[0, ci, 0:1, :].astype(jnp.float32)
                absb = absb + jnp.abs(previmg_ref[ci:ci + 1, :] - top)
            bd = jnp.abs(prevd_ref[...] - d[0:1, :])
            accy_ref[0:1, :] += bd * jnp.exp(absb * (-inv_c))

        # Carry this tile's last rows for the next H tile (cheap, unconditional).
        prevd_ref[...] = d[th - 1:th, :]
        for ci in range(c):
            previmg_ref[ci:ci + 1, :] = img_ref[0, ci, th - 1:th, :].astype(jnp.float32)

        @pl.when(hi == nh_per - 1)
        def _finalize():
            sum_x = jnp.sum(accx_ref[...])
            sum_y = jnp.sum(accy_ref[...])
            out_ref[...] = (jnp.where(lane == 0, sum_x, 0.0)
                            + jnp.where(lane == 1, sum_y, 0.0))[None]

    return kernel


def inverse_depth_smoothness_loss_pallas(disparity, image, max_disparity, *,
                                         tile_h=None,
                                         image_stream_dtype=jnp.bfloat16,
                                         disparity_stream_dtype=None,
                                         bf16_image_diffs=False):
    """disparity: (B,1,H,W), image: (B,C,H,W) already resized to (H,W).

    bf16_image_diffs / disparity_stream_dtype are opt-in perf knobs (v6e/v7x
    VALU trim / v5e HBM trim); defaults keep full-f32 accuracy.
    """
    b, _, h, w = disparity.shape
    c = image.shape[1]
    # TODO(synk): for W far from a multiple of 128 (or W < ~256) a lane-dense
    # row-folding reshape in glue would raise vreg utilization; not done here.

    img = image.astype(image_stream_dtype)
    disp = (disparity if disparity_stream_dtype is None
            else disparity.astype(disparity_stream_dtype))
    img_isz = jnp.dtype(img.dtype).itemsize
    disp_isz = jnp.dtype(disp.dtype).itemsize

    vmem_limit = _vmem_limit_bytes()
    if tile_h is None:
        th = _choose_tile_h(h, w, c, img_isz, disp_isz, budget_bytes=vmem_limit // 2)
    else:
        th = int(tile_h)
        if th < 8 or th % 8 != 0:
            raise ValueError(f"tile_h must be a multiple of 8, got {th}")

    nh = -(-h // th)                   # cdiv
    h_pad = nh * th

    # Megacore (v7x): with B==1 split the H range into two parallel halves.
    hs = 2 if (b == 1 and nh >= 2 and nh % 2 == 0) else 1
    nh_per = nh // hs
    single_tile = (nh_per == 1)

    # dy term for the row pair straddling the split boundary (glue, hs == 2).
    straddle = jnp.float32(0.0)
    if hs == 2:
        r = nh_per * th
        d0 = disp[:, 0, r - 1, :].astype(jnp.float32)
        d1 = disp[:, 0, r, :].astype(jnp.float32)
        i0 = img[:, :, r - 1, :].astype(jnp.float32)
        i1 = img[:, :, r, :].astype(jnp.float32)
        wgt = jnp.exp(-jnp.mean(jnp.abs(i0 - i1), axis=1))
        straddle = jnp.sum(jnp.abs(d0 - d1) * wgt)

    if h_pad > h:                      # zero-pad: padded rows masked in-kernel
        pad = ((0, 0), (0, 0), (0, h_pad - h), (0, 0))
        disp = jnp.pad(disp, pad)
        img = jnp.pad(img, pad)

    kernel = _make_kernel(c=c, th=th, w=w, true_h=h, nh_per=nh_per,
                          single_tile=single_tile, bf16_diffs=bf16_image_diffs)

    scratch = []
    if not single_tile:
        scratch = [
            pltpu.VMEM((8, w), jnp.float32),       # running sx partials
            pltpu.VMEM((8, w), jnp.float32),       # running sy partials
            pltpu.VMEM((1, w), jnp.float32),       # carried last disparity row
            pltpu.VMEM((c, w), jnp.float32),       # carried last image row / channel
        ]

    cost = pl.CostEstimate(
        flops=int((6 * c + 14) * b * h_pad * w),
        transcendentals=int(2 * b * h_pad * w),
        bytes_accessed=int(disp.size * disp_isz + img.size * img_isz
                           + b * hs * 128 * 4),
    )

    partials = pl.pallas_call(
        kernel,
        out_shape=jax.ShapeDtypeStruct((b * hs, 1, 128), jnp.float32),
        grid=(hs, b, nh_per),
        in_specs=[
            pl.BlockSpec((1, 1, th, w), lambda s, bi, hi: (bi, 0, s * nh_per + hi, 0)),
            pl.BlockSpec((1, c, th, w), lambda s, bi, hi: (bi, 0, s * nh_per + hi, 0)),
        ],
        out_specs=pl.BlockSpec((1, 1, 128), lambda s, bi, hi: (bi * hs + s, 0, 0)),
        scratch_shapes=scratch,
        compiler_params=pltpu.CompilerParams(
            dimension_semantics=("parallel", "parallel", "arbitrary"),
            vmem_limit_bytes=vmem_limit,
        ),
        cost_estimate=cost,
    )(disp, img)

    sum_x = jnp.sum(partials[:, 0, 0])
    sum_y = jnp.sum(partials[:, 0, 1]) + straddle
    # |d(disp/max)| = (1/|max|) * |d(disp)|: the scale factors out of the sums.
    inv_max = jnp.abs(jnp.float32(1.0) / jnp.asarray(max_disparity, jnp.float32))
    nx = b * h * (w - 1)
    ny = b * (h - 1) * w
    return inv_max * (sum_x / nx + sum_y / ny)


def smoothness_loss_forward(batch_data, output, max_disparity, *, tile_h=None,
                            **kwargs):
    """Mirrors SmoothnessLoss.forward."""
    scale = output.get("scale", 1)
    disparity = output.get("disparity")
    # TODO(synk): null_loss()/valid_loss() wrappers and utils.get_* hparam helpers
    # are project-specific bookkeeping; the "null" case simply returns 0.0 here.
    if scale == 1 or disparity is None:
        return jnp.float32(0.0)

    image = batch_data["image"]  # (B, C, H_img, W_img), NCHW
    b, c = image.shape[0], image.shape[1]
    h, w = disparity.shape[2], disparity.shape[3]
    # TODO(synk): the bilinear downsample could be fused into the Pallas kernel
    # (DMA full-res rows, average in-kernel); kept as XLA glue because the
    # resize factor is not guaranteed to be an integer.
    image = jax.image.resize(image, (b, c, h, w), method="bilinear", antialias=False)

    return inverse_depth_smoothness_loss_pallas(disparity, image, max_disparity,
                                                tile_h=tile_h, **kwargs)


def _reference_loss(disparity, image, max_disparity):
    """Pure-JAX reference (kornia formula) for verification."""
    idepth = disparity.astype(jnp.float32) / jnp.float32(max_disparity)
    image = image.astype(jnp.float32)
    idx = idepth[:, :, :, :-1] - idepth[:, :, :, 1:]
    idy = idepth[:, :, :-1, :] - idepth[:, :, 1:, :]
    imx = image[:, :, :, :-1] - image[:, :, :, 1:]
    imy = image[:, :, :-1, :] - image[:, :, 1:, :]
    wx = jnp.exp(-jnp.mean(jnp.abs(imx), axis=1, keepdims=True))
    wy = jnp.exp(-jnp.mean(jnp.abs(imy), axis=1, keepdims=True))
    return jnp.mean(jnp.abs(idx * wx)) + jnp.mean(jnp.abs(idy * wy))


def _check(key, b, c, h, w, max_disparity, tile_h):
    k_disp, k_img = jax.random.split(key)
    disparity = jax.random.uniform(k_disp, (b, 1, h, w), jnp.float32, 1.0, 100.0)
    image = jax.random.uniform(k_img, (b, c, 2 * h, 2 * w), jnp.float32, 0.0, 1.0)

    batch_data = {"image": image}
    output = {"scale": 2, "disparity": disparity}
    loss = smoothness_loss_forward(batch_data, output, max_disparity, tile_h=tile_h)
    loss = jax.block_until_ready(loss)

    # Reference consumes the same bf16-rounded image that the kernel streams.
    img_resized = jax.image.resize(image, (b, c, h, w), method="bilinear",
                                   antialias=False)
    img_stream = img_resized.astype(jnp.bfloat16).astype(jnp.float32)
    ref = jax.block_until_ready(_reference_loss(disparity, img_stream, max_disparity))
    assert jnp.allclose(loss, ref, rtol=1e-4, atol=1e-6), (b, h, w, loss, ref)


if __name__ == "__main__":
    key = jax.random.PRNGKey(0)
    k1, k2, k3 = jax.random.split(key, 3)
    max_disparity = 192.0

    # 1) B=2, H=16, tile_h=8 -> grid (1,2,2): exercises the intra-split H-tile
    #    boundary carry + deferred lane-vector accumulation path.
    _check(k1, b=2, c=3, h=16, w=16, max_disparity=max_disparity, tile_h=8)

    # 2) B=1, H=16, tile_h=8 -> hs=2 megacore split, single-tile kernel variant
    #    plus the straddling-row dy term added in glue.
    _check(k2, b=1, c=3, h=16, w=16, max_disparity=max_disparity, tile_h=8)

    # 3) B=2, H=12 (not a multiple of 8), tile_h=8 -> zero-padding + global-row
    #    mask path.
    _check(k3, b=2, c=3, h=12, w=16, max_disparity=max_disparity, tile_h=8)

    print("KERNEL_OK")
</pallas_src>

<mosaic_0001>
module attributes {stable_mosaic.version = 11 : i64} {
  func.func @kernel(%arg0: i32, %arg1: i32, %arg2: i32, %arg3: memref<1x1x8x16xf32, #tpu.memory_space<vmem>>, %arg4: memref<1x3x8x16xbf16, #tpu.memory_space<vmem>>, %arg5: memref<1x1x128xf32, #tpu.memory_space<vmem>>, %arg6: memref<8x16xf32, #tpu.memory_space<vmem>>, %arg7: memref<8x16xf32, #tpu.memory_space<vmem>>, %arg8: memref<1x16xf32, #tpu.memory_space<vmem>>, %arg9: memref<3x16xf32, #tpu.memory_space<vmem>>) attributes {dimension_semantics = [#tpu.dimension_semantics<parallel>, #tpu.dimension_semantics<parallel>, #tpu.dimension_semantics<arbitrary>], iteration_bounds = array<i64: 1, 2, 2>, scalar_prefetch = 0 : i64, scratch_operands = 4 : i64, tpu.core_type = #tpu.core_type<tc>, window_params = [{transform_indices = @transform_0, window_bounds = array<i64: 1, 1, 8, 16>}, {transform_indices = @transform_1, window_bounds = array<i64: 1, 3, 8, 16>}, {transform_indices = @transform_2, window_bounds = array<i64: 1, 1, 128>}]} {
    %c0 = arith.constant 0 : index
    %c0_0 = arith.constant 0 : index
    %c0_1 = arith.constant 0 : index
    %c0_2 = arith.constant 0 : index
    %0 = vector.load %arg3[%c0, %c0_0, %c0_1, %c0_2] : memref<1x1x8x16xf32, #tpu.memory_space<vmem>>, vector<1x1x8x16xf32>
    %1 = vector.shape_cast %0 : vector<1x1x8x16xf32> to vector<8x16xf32>
    %cst = arith.constant 0.000000e+00 : f32
    %2 = vector.broadcast %cst : f32 to vector<8x16xf32>
    %cst_3 = arith.constant 0.000000e+00 : f32
    %3 = vector.broadcast %cst_3 : f32 to vector<8x16xf32>
    %c0_4 = arith.constant 0 : index
    %c0_5 = arith.constant 0 : index
    %c0_6 = arith.constant 0 : index
    %c0_7 = arith.constant 0 : index
    %4 = vector.load %arg4[%c0_4, %c0_5, %c0_6, %c0_7] : memref<1x3x8x16xbf16, #tpu.memory_space<vmem>>, vector<1x1x8x16xbf16>
    %5 = vector.shape_cast %4 : vector<1x1x8x16xbf16> to vector<8x16xbf16>
    %6 = arith.extf %5 : vector<8x16xbf16> to vector<8x16xf32>
    %c15_i32 = arith.constant 15 : i32
    %7 = tpu.dynamic_rotate %6 by %c15_i32 dim 1 : vector<8x16xf32>, i32 -> vector<8x16xf32>
    %8 = arith.subf %6, %7 : vector<8x16xf32>
    %9 = math.absf %8 : vector<8x16xf32>
    %10 = arith.addf %2, %9 : vector<8x16xf32>
    %c7_i32 = arith.constant 7 : i32
    %11 = tpu.dynamic_rotate %6 by %c7_i32 dim 0 : vector<8x16xf32>, i32 -> vector<8x16xf32>
    %12 = arith.subf %6, %11 : vector<8x16xf32>
    %13 = math.absf %12 : vector<8x16xf32>
    %14 = arith.addf %3, %13 : vector<8x16xf32>
    %c0_8 = arith.constant 0 : index
    %c1 = arith.constant 1 : index
    %c0_9 = arith.constant 0 : index
    %c0_10 = arith.constant 0 : index
    %15 = vector.load %arg4[%c0_8, %c1, %c0_9, %c0_10] : memref<1x3x8x16xbf16, #tpu.memory_space<vmem>>, vector<1x1x8x16xbf16>
    %16 = vector.shape_cast %15 : vector<1x1x8x16xbf16> to vector<8x16xbf16>
    %17 = arith.extf %16 : vector<8x16xbf16> to vector<8x16xf32>
    %c15_i32_11 = arith.constant 15 : i32
    %18 = tpu.dynamic_rotate %17 by %c15_i32_11 dim 1 : vector<8x16xf32>, i32 -> vector<8x16xf32>
    %19 = arith.subf %17, %18 : vector<8x16xf32>
    %20 = math.absf %19 : vector<8x16xf32>
    %21 = arith.addf %10, %20 : vector<8x16xf32>
    %c7_i32_12 = arith.constant 7 : i32
    %22 = tpu.dynamic_rotate %17 by %c7_i32_12 dim 0 : vector<8x16xf32>, i32 -> vector<8x16xf32>
    %23 = arith.subf %17, %22 : vector<8x16xf32>
    %24 = math.absf %23 : vector<8x16xf32>
    %25 = arith.addf %14, %24 : vector<8x16xf32>
    %c0_13 = arith.constant 0 : index
    %c2 = arith.constant 2 : index
    %c0_14 = arith.constant 0 : index
    %c0_15 = arith.constant 0 : index
    %26 = vector.load %arg4[%c0_13, %c2, %c0_14, %c0_15] : memref<1x3x8x16xbf16, #tpu.memory_space<vmem>>, vector<1x1x8x16xbf16>
    %27 = vector.shape_cast %26 : vector<1x1x8x16xbf16> to vector<8x16xbf16>
    %28 = arith.extf %27 : vector<8x16xbf16> to vector<8x16xf32>
    %c15_i32_16 = arith.constant 15 : i32
    %29 = tpu.dynamic_rotate %28 by %c15_i32_16 dim 1 : vector<8x16xf32>, i32 -> vector<8x16xf32>
    %30 = arith.subf %28, %29 : vector<8x16xf32>
    %31 = math.absf %30 : vector<8x16xf32>
    %32 = arith.addf %21, %31 : vector<8x16xf32>
    %c7_i32_17 = arith.constant 7 : i32
    %33 = tpu.dynamic_rotate %28 by %c7_i32_17 dim 0 : vector<8x16xf32>, i32 -> vector<8x16xf32>
    %34 = arith.subf %28, %33 : vector<8x16xf32>
    %35 = math.absf %34 : vector<8x16xf32>
    %36 = arith.addf %25, %35 : vector<8x16xf32>
    %c15_i32_18 = arith.constant 15 : i32
    %37 = tpu.dynamic_rotate %1 by %c15_i32_18 dim 1 : vector<8x16xf32>, i32 -> vector<8x16xf32>
    %38 = arith.subf %1, %37 : vector<8x16xf32>
    %c7_i32_19 = arith.constant 7 : i32
    %39 = tpu.dynamic_rotate %1 by %c7_i32_19 dim 0 : vector<8x16xf32>, i32 -> vector<8x16xf32>
    %40 = arith.subf %1, %39 : vector<8x16xf32>
    %41 = tpu.iota {dimensions = array<i32: 1>} : vector<1x16xi32>
    %c15_i32_20 = arith.constant 15 : i32
    %42 = vector.broadcast %c15_i32_20 : i32 to vector<1x16xi32>
    %43 = arith.cmpi slt, %41, %42 : vector<1x16xi32>
    %44 = arith.extui %43 : vector<1x16xi1> to vector<1x16xi32>
    %45 = arith.sitofp %44 : vector<1x16xi32> to vector<1x16xf32>
    %46 = tpu.iota {dimensions = array<i32: 0>} : vector<8x1xi32>
    %c2_i32 = arith.constant 2 : i32
    %47 = arith.muli %arg0, %c2_i32 : i32
    %48 = arith.addi %47, %arg2 : i32
    %c8_i32 = arith.constant 8 : i32
    %49 = arith.muli %48, %c8_i32 : i32
    %50 = vector.broadcast %49 : i32 to vector<8x1xi32>
    %51 = arith.addi %50, %46 : vector<8x1xi32>
    %c7_i32_21 = arith.constant 7 : i32
    %52 = vector.broadcast %c7_i32_21 : i32 to vector<8x1xi32>
    %53 = arith.cmpi slt, %46, %52 : vector<8x1xi32>
    %c15_i32_22 = arith.constant 15 : i32
    %54 = vector.broadcast %c15_i32_22 : i32 to vector<8x1xi32>
    %55 = arith.cmpi slt, %51, %54 : vector<8x1xi32>
    %56 = arith.andi %53, %55 : vector<8x1xi1>
    %57 = arith.extui %56 : vector<8x1xi1> to vector<8x1xi32>
    %58 = arith.sitofp %57 : vector<8x1xi32> to vector<8x1xf32>
    %cst_23 = arith.constant -0.333333343 : f32
    %59 = vector.broadcast %cst_23 : f32 to vector<8x16xf32>
    %60 = arith.mulf %32, %59 : vector<8x16xf32>
    %61 = math.exp %60 : vector<8x16xf32>
    %62 = vector.broadcast %45 : vector<1x16xf32> to vector<8x16xf32>
    %63 = arith.mulf %61, %62 : vector<8x16xf32>
    %cst_24 = arith.constant -0.333333343 : f32
    %64 = vector.broadcast %cst_24 : f32 to vector<8x16xf32>
    %65 = arith.mulf %36, %64 : vector<8x16xf32>
    %66 = math.exp %65 : vector<8x16xf32>
    %67 = vector.broadcast %58 : vector<8x1xf32> to vector<8x16xf32>
    %68 = arith.mulf %66, %67 : vector<8x16xf32>
    %69 = math.absf %38 : vector<8x16xf32>
    %70 = arith.mulf %69, %63 : vector<8x16xf32>
    %71 = math.absf %40 : vector<8x16xf32>
    %72 = arith.mulf %71, %68 : vector<8x16xf32>
    %73 = tpu.iota {dimensions = array<i32: 1>} : vector<1x128xi32>
    %c0_i32 = arith.constant 0 : i32
    %74 = arith.cmpi eq, %arg2, %c0_i32 : i32
    %75 = arith.extui %74 : i1 to i32
    %c0_i32_25 = arith.constant 0 : i32
    %76 = arith.cmpi ne, %75, %c0_i32_25 : i32
    scf.if %76 {
      %cst_58 = arith.constant 0.000000e+00 : f32
      %107 = vector.broadcast %cst_58 : f32 to vector<8x16xf32>
      %c0_59 = arith.constant 0 : index
      %c0_60 = arith.constant 0 : index
      %108 = vector.load %arg6[%c0_59, %c0_60] : memref<8x16xf32, #tpu.memory_space<vmem>>, vector<8x16xf32>
      tpu.vector_store %arg6[%c0_59, %c0_60], %107 {strides = array<i32>} : memref<8x16xf32, #tpu.memory_space<vmem>>, vector<8x16xf32>,
      %cst_61 = arith.constant 0.000000e+00 : f32
      %109 = vector.broadcast %cst_61 : f32 to vector<8x16xf32>
      %c0_62 = arith.constant 0 : index
      %c0_63 = arith.constant 0 : index
      %110 = vector.load %arg7[%c0_62, %c0_63] : memref<8x16xf32, #tpu.memory_space<vmem>>, vector<8x16xf32>
      tpu.vector_store %arg7[%c0_62, %c0_63], %109 {strides = array<i32>} : memref<8x16xf32, #tpu.memory_space<vmem>>, vector<8x16xf32>,
    } else {
    }
    %c0_26 = arith.constant 0 : index
    %c0_27 = arith.constant 0 : index
    %77 = vector.load %arg6[%c0_26, %c0_27] : memref<8x16xf32, #tpu.memory_space<vmem>>, vector<8x16xf32>
    %78 = vector.shape_cast %70 : vector<8x16xf32> to vector<1x8x16xf32>
    %cst_28 = arith.constant dense<0.000000e+00> : vector<8x16xf32>
    %79 = vector.multi_reduction <add>, %78, %cst_28 [0] : vector<1x8x16xf32> to vector<8x16xf32>
    %80 = arith.addf %77, %79 : vector<8x16xf32>
    %c0_29 = arith.constant 0 : index
    %c0_30 = arith.constant 0 : index
    %81 = vector.load %arg6[%c0_29, %c0_30] : memref<8x16xf32, #tpu.memory_space<vmem>>, vector<8x16xf32>
    tpu.vector_store %arg6[%c0_29, %c0_30], %80 {strides = array<i32>} : memref<8x16xf32, #tpu.memory_space<vmem>>, vector<8x16xf32>,
    %c0_31 = arith.constant 0 : index
    %c0_32 = arith.constant 0 : index
    %82 = vector.load %arg7[%c0_31, %c0_32] : memref<8x16xf32, #tpu.memory_space<vmem>>, vector<8x16xf32>
    %83 = vector.shape_cast %72 : vector<8x16xf32> to vector<1x8x16xf32>
    %cst_33 = arith.constant dense<0.000000e+00> : vector<8x16xf32>
    %84 = vector.multi_reduction <add>, %83, %cst_33 [0] : vector<1x8x16xf32> to vector<8x16xf32>
    %85 = arith.addf %82, %84 : vector<8x16xf32>
    %c0_34 = arith.constant 0 : index
    %c0_35 = arith.constant 0 : index
    %86 = vector.load %arg7[%c0_34, %c0_35] : memref<8x16xf32, #tpu.memory_space<vmem>>, vector<8x16xf32>
    tpu.vector_store %arg7[%c0_34, %c0_35], %85 {strides = array<i32>} : memref<8x16xf32, #tpu.memory_space<vmem>>, vector<8x16xf32>,
    %c0_i32_36 = arith.constant 0 : i32
    %87 = arith.cmpi sgt, %arg2, %c0_i32_36 : i32
    %88 = arith.extui %87 : i1 to i32
    %c0_i32_37 = arith.constant 0 : i32
    %89 = arith.cmpi ne, %88, %c0_i32_37 : i32
    scf.if %89 {
      %cst_58 = arith.constant 0.000000e+00 : f32
      %107 = vector.broadcast %cst_58 : f32 to vector<1x16xf32>
      %c0_59 = arith.constant 0 : index
      %c0_60 = arith.constant 0 : index
      %c0_61 = arith.constant 0 : index
      %c0_62 = arith.constant 0 : index
      %108 = vector.load %arg4[%c0_59, %c0_60, %c0_61, %c0_62] : memref<1x3x8x16xbf16, #tpu.memory_space<vmem>>, vector<1x1x1x16xbf16>
      %109 = vector.shape_cast %108 : vector<1x1x1x16xbf16> to vector<1x16xbf16>
      %110 = arith.extf %109 : vector<1x16xbf16> to vector<1x16xf32>
      %c0_63 = arith.constant 0 : index
      %c0_64 = arith.constant 0 : index
      %111 = vector.load %arg9[%c0_63, %c0_64] : memref<3x16xf32, #tpu.memory_space<vmem>>, vector<1x16xf32>
      %112 = arith.subf %111, %110 : vector<1x16xf32>
      %113 = math.absf %112 : vector<1x16xf32>
      %114 = arith.addf %107, %113 : vector<1x16xf32>
      %c0_65 = arith.constant 0 : index
      %c1_66 = arith.constant 1 : index
      %c0_67 = arith.constant 0 : index
      %c0_68 = arith.constant 0 : index
      %115 = vector.load %arg4[%c0_65, %c1_66, %c0_67, %c0_68] : memref<1x3x8x16xbf16, #tpu.memory_space<vmem>>, vector<1x1x1x16xbf16>
      %116 = vector.shape_cast %115 : vector<1x1x1x16xbf16> to vector<1x16xbf16>
      %117 = arith.extf %116 : vector<1x16xbf16> to vector<1x16xf32>
      %c1_69 = arith.constant 1 : index
      %c0_70 = arith.constant 0 : index
      %118 = vector.load %arg9[%c1_69, %c0_70] : memref<3x16xf32, #tpu.memory_space<vmem>>, vector<1x16xf32>
      %119 = arith.subf %118, %117 : vector<1x16xf32>
      %120 = math.absf %119 : vector<1x16xf32>
      %121 = arith.addf %114, %120 : vector<1x16xf32>
      %c0_71 = arith.constant 0 : index
      %c2_72 = arith.constant 2 : index
      %c0_73 = arith.constant 0 : index
      %c0_74 = arith.constant 0 : index
      %122 = vector.load %arg4[%c0_71, %c2_72, %c0_73, %c0_74] : memref<1x3x8x16xbf16, #tpu.memory_space<vmem>>, vector<1x1x1x16xbf16>
      %123 = vector.shape_cast %122 : vector<1x1x1x16xbf16> to vector<1x16xbf16>
      %124 = arith.extf %123 : vector<1x16xbf16> to vector<1x16xf32>
      %c2_75 = arith.constant 2 : index
      %c0_76 = arith.constant 0 : index
      %125 = vector.load %arg9[%c2_75, %c0_76] : memref<3x16xf32, #tpu.memory_space<vmem>>, vector<1x16xf32>
      %126 = arith.subf %125, %124 : vector<1x16xf32>
      %127 = math.absf %126 : vector<1x16xf32>
      %128 = arith.addf %121, %127 : vector<1x16xf32>
      %c0_77 = arith.constant 0 : index
      %c0_78 = arith.constant 0 : index
      %129 = vector.load %arg8[%c0_77, %c0_78] : memref<1x16xf32, #tpu.memory_space<vmem>>, vector<1x16xf32>
      %130 = vector.extract_strided_slice %1 {offsets = [0, 0], sizes = [1, 16], strides = [1, 1]} : vector<8x16xf32> to vector<1x16xf32>
      %131 = arith.subf %129, %130 : vector<1x16xf32>
      %132 = math.absf %131 : vector<1x16xf32>
      %c0_79 = arith.constant 0 : index
      %c0_80 = arith.constant 0 : index
      %133 = vector.load %arg7[%c0_79, %c0_80] : memref<8x16xf32, #tpu.memory_space<vmem>>, vector<1x16xf32>
      %cst_81 = arith.constant -0.333333343 : f32
      %134 = vector.broadcast %cst_81 : f32 to vector<1x16xf32>
      %135 = arith.mulf %128, %134 : vector<1x16xf32>
      %136 = math.exp %135 : vector<1x16xf32>
      %137 = arith.mulf %132, %136 : vector<1x16xf32>
      %138 = arith.addf %133, %137 : vector<1x16xf32>
      %c0_82 = arith.constant 0 : index
      %c0_83 = arith.constant 0 : index
      %139 = vector.load %arg7[%c0_82, %c0_83] : memref<8x16xf32, #tpu.memory_space<vmem>>, vector<1x16xf32>
      tpu.vector_store %arg7[%c0_82, %c0_83], %138 {strides = array<i32>} : memref<8x16xf32, #tpu.memory_space<vmem>>, vector<1x16xf32>,
    } else {
    }
    %90 = vector.extract_strided_slice %1 {offsets = [7, 0], sizes = [1, 16], strides = [1, 1]} : vector<8x16xf32> to vector<1x16xf32>
    %c0_38 = arith.constant 0 : index
    %c0_39 = arith.constant 0 : index
    %91 = vector.load %arg8[%c0_38, %c0_39] : memref<1x16xf32, #tpu.memory_space<vmem>>, vector<1x16xf32>
    tpu.vector_store %arg8[%c0_38, %c0_39], %90 {strides = array<i32>} : memref<1x16xf32, #tpu.memory_space<vmem>>, vector<1x16xf32>,
    %c0_40 = arith.constant 0 : index
    %c0_41 = arith.constant 0 : index
    %c7 = arith.constant 7 : index
    %c0_42 = arith.constant 0 : index
    %92 = vector.load %arg4[%c0_40, %c0_41, %c7, %c0_42] : memref<1x3x8x16xbf16, #tpu.memory_space<vmem>>, vector<1x1x1x16xbf16>
    %93 = vector.shape_cast %92 : vector<1x1x1x16xbf16> to vector<1x16xbf16>
    %94 = arith.extf %93 : vector<1x16xbf16> to vector<1x16xf32>
    %c0_43 = arith.constant 0 : index
    %c0_44 = arith.constant 0 : index
    %95 = vector.load %arg9[%c0_43, %c0_44] : memref<3x16xf32, #tpu.memory_space<vmem>>, vector<1x16xf32>
    tpu.vector_store %arg9[%c0_43, %c0_44], %94 {strides = array<i32>} : memref<3x16xf32, #tpu.memory_space<vmem>>, vector<1x16xf32>,
    %c0_45 = arith.constant 0 : index
    %c1_46 = arith.constant 1 : index
    %c7_47 = arith.constant 7 : index
    %c0_48 = arith.constant 0 : index
    %96 = vector.load %arg4[%c0_45, %c1_46, %c7_47, %c0_48] : memref<1x3x8x16xbf16, #tpu.memory_space<vmem>>, vector<1x1x1x16xbf16>
    %97 = vector.shape_cast %96 : vector<1x1x1x16xbf16> to vector<1x16xbf16>
    %98 = arith.extf %97 : vector<1x16xbf16> to vector<1x16xf32>
    %c1_49 = arith.constant 1 : index
    %c0_50 = arith.constant 0 : index
    %99 = vector.load %arg9[%c1_49, %c0_50] : memref<3x16xf32, #tpu.memory_space<vmem>>, vector<1x16xf32>
    tpu.vector_store %arg9[%c1_49, %c0_50], %98 {strides = array<i32>} : memref<3x16xf32, #tpu.memory_space<vmem>>, vector<1x16xf32>,
    %c0_51 = arith.constant 0 : index
    %c2_52 = arith.constant 2 : index
    %c7_53 = arith.constant 7 : index
    %c0_54 = arith.constant 0 : index
    %100 = vector.load %arg4[%c0_51, %c2_52, %c7_53, %c0_54] : memref<1x3x8x16xbf16, #tpu.memory_space<vmem>>, vector<1x1x1x16xbf16>
    %101 = vector.shape_cast %100 : vector<1x1x1x16xbf16> to vector<1x16xbf16>
    %102 = arith.extf %101 : vector<1x16xbf16> to vector<1x16xf32>
    %c2_55 = arith.constant 2 : index
    %c0_56 = arith.constant 0 : index
    %103 = vector.load %arg9[%c2_55, %c0_56] : memref<3x16xf32, #tpu.memory_space<vmem>>, vector<1x16xf32>
    tpu.vector_store %arg9[%c2_55, %c0_56], %102 {strides = array<i32>} : memref<3x16xf32, #tpu.memory_space<vmem>>, vector<1x16xf32>,
    %c1_i32 = arith.constant 1 : i32
    %104 = arith.cmpi eq, %arg2, %c1_i32 : i32
    %105 = arith.extui %104 : i1 to i32
    %c0_i32_57 = arith.constant 0 : i32
    %106 = arith.cmpi ne, %105, %c0_i32_57 : i32
    scf.if %106 {
      %c0_58 = arith.constant 0 : index
      %c0_59 = arith.constant 0 : index
      %107 = vector.load %arg6[%c0_58, %c0_59] : memref<8x16xf32, #tpu.memory_space<vmem>>, vector<8x16xf32>
      %108 = vector.shape_cast %107 : vector<8x16xf32> to vector<1x8x16xf32>
      %cst_60 = arith.constant dense<0.000000e+00> : vector<1xf32>
      %109 = vector.multi_reduction <add>, %108, %cst_60 [1, 2] : vector<1x8x16xf32> to vector<1xf32>
      %110 = vector.shape_cast %109 : vector<1xf32> to vector<1x1x1xf32>
      %111 = vector.extract %110[0, 0, 0] : f32 from vector<1x1x1xf32>
      %c0_61 = arith.constant 0 : index
      %c0_62 = arith.constant 0 : index
      %112 = vector.load %arg7[%c0_61, %c0_62] : memref<8x16xf32, #tpu.memory_space<vmem>>, vector<8x16xf32>
      %113 = vector.shape_cast %112 : vector<8x16xf32> to vector<1x8x16xf32>
      %cst_63 = arith.constant dense<0.000000e+00> : vector<1xf32>
      %114 = vector.multi_reduction <add>, %113, %cst_63 [1, 2] : vector<1x8x16xf32> to vector<1xf32>
      %115 = vector.shape_cast %114 : vector<1xf32> to vector<1x1x1xf32>
      %116 = vector.extract %115[0, 0, 0] : f32 from vector<1x1x1xf32>
      %c0_i32_64 = arith.constant 0 : i32
      %117 = vector.broadcast %c0_i32_64 : i32 to vector<1x128xi32>
      %118 = arith.cmpi eq, %73, %117 : vector<1x128xi32>
      %cst_65 = arith.constant 0.000000e+00 : f32
      %119 = vector.broadcast %111 : f32 to vector<1x128xf32>
      %120 = vector.broadcast %cst_65 : f32 to vector<1x128xf32>
      %121 = arith.select %118, %119, %120 : vector<1x128xi1>, vector<1x128xf32>
      %c1_i32_66 = arith.constant 1 : i32
      %122 = vector.broadcast %c1_i32_66 : i32 to vector<1x128xi32>
      %123 = arith.cmpi eq, %73, %122 : vector<1x128xi32>
      %cst_67 = arith.constant 0.000000e+00 : f32
      %124 = vector.broadcast %116 : f32 to vector<1x128xf32>
      %125 = vector.broadcast %cst_67 : f32 to vector<1x128xf32>
      %126 = arith.select %123, %124, %125 : vector<1x128xi1>, vector<1x128xf32>
      %127 = arith.addf %121, %126 : vector<1x128xf32>
      %128 = vector.shape_cast %127 : vector<1x128xf32> to vector<1x1x128xf32>
      %c0_68 = arith.constant 0 : index
      %c0_69 = arith.constant 0 : index
      %c0_70 = arith.constant 0 : index
      %129 = vector.load %arg5[%c0_68, %c0_69, %c0_70] : memref<1x1x128xf32, #tpu.memory_space<vmem>>, vector<1x1x128xf32>
      tpu.vector_store %arg5[%c0_68, %c0_69, %c0_70], %128 {strides = array<i32>} : memref<1x1x128xf32, #tpu.memory_space<vmem>>, vector<1x1x128xf32>,
    } else {
    }
    return
  }
  func.func @transform_0(%arg0: i32, %arg1: i32, %arg2: i32) -> (i32, i32, i32, i32) {
    %c2_i32 = arith.constant 2 : i32
    %0 = arith.muli %arg0, %c2_i32 : i32
    %1 = arith.addi %0, %arg2 : i32
    %c0_i32 = arith.constant 0 : i32
    %c0_i32_0 = arith.constant 0 : i32
    %c0_i32_1 = arith.constant 0 : i32
    return %arg1, %c0_i32, %1, %c0_i32_0 : i32, i32, i32, i32
  }
  func.func @transform_1(%arg0: i32, %arg1: i32, %arg2: i32) -> (i32, i32, i32, i32) {
    %c2_i32 = arith.constant 2 : i32
    %0 = arith.muli %arg0, %c2_i32 : i32
    %1 = arith.addi %0, %arg2 : i32
    %c0_i32 = arith.constant 0 : i32
    %c0_i32_0 = arith.constant 0 : i32
    %c0_i32_1 = arith.constant 0 : i32
    return %arg1, %c0_i32, %1, %c0_i32_0 : i32, i32, i32, i32
  }
  func.func @transform_2(%arg0: i32, %arg1: i32, %arg2: i32) -> (i32, i32, i32) {
    %c1_i32 = arith.constant 1 : i32
    %0 = arith.muli %arg1, %c1_i32 : i32
    %1 = arith.addi %0, %arg0 : i32
    %c0_i32 = arith.constant 0 : i32
    %c0_i32_0 = arith.constant 0 : i32
    %c0_i32_1 = arith.constant 0 : i32
    return %1, %c0_i32, %c0_i32_0 : i32, i32, i32
  }
}

</mosaic_0001>

<llo_original>
// kernel: tpu_custom_call.1
$region0: #{tpu_custom_call.1}
  #allocation0 [shape = 'u32[]', space=smem, size = 0x4, offset = 0x4, fixed_abs, tag = 'smem constant byte address 0x4 - core index']
  #allocation1 [shape = 'u32[144,128]{1,0:T(1,128)}', space=vmem, size = 0x12000, scoped, tag = 'internal scratch']
  #allocation2 [shape = 'f32[8,16]{1,0:T(8,128)}', space=vmem, size = 0x1000, scoped, tag = 'scratch operand']
  #allocation3 [shape = 'f32[8,16]{1,0:T(8,128)}', space=vmem, size = 0x1000, scoped, tag = 'scratch operand']
  #allocation4 [shape = 'f32[1,16]{1,0:T(1,128)}', space=vmem, size = 0x200, scoped, tag = 'scratch operand']
  #allocation5 [shape = 'f32[3,16]{1,0:T(4,128)}', space=vmem, size = 0x800, scoped, tag = 'scratch operand']
  %s0 = inlined_call_operand.hbm [shape: f32[2,1,16,16], index: 0, kind: input, shape index: {}]
  %s1 = inlined_call_operand.hbm [shape: bf16[2,3,16,16], index: 1, kind: input, shape index: {}]
  %s2 = inlined_call_operand.hbm [shape: f32[2,1,128], index: 2, kind: output, shape index: {}]
  %s3 = sld [smem:[#allocation0]]
  $region61: #{tpu_custom_call.1} parent=0
    _
  %s5 = ssub.s32 1, %s3
  %s6 = scalar_select 0, %s5, %s3
  $region1: #{tpu_custom_call.1} parent=0
    #allocation6 [shape = 'u8[8192]{0}', space=vmem, size = 0x2000, scoped, tag = 'input window, operand 0']
    #allocation7 [shape = 's32[2]{0}', space=sflag, size = 0x8, scoped, tag = 'scoped memory for tpu_custom_call.1']
    #allocation8 [shape = 's32[2]{0}', space=sflag, size = 0x8, scoped, tag = 'scoped memory for tpu_custom_call.1']
    #allocation9 [shape = 'u8[12288]{0}', space=vmem, size = 0x3000, scoped, tag = 'input window, operand 1']
    #allocation10 [shape = 's32[2]{0}', space=sflag, size = 0x8, scoped, tag = 'scoped memory for tpu_custom_call.1']
    #allocation11 [shape = 'u8[1024]{0}', space=vmem, size = 0x400, scoped, tag = 'output window, operand 0']
    %7 = vsyncpa [#allocation7], 0
    %s8 = scalar_lea.sflag [#allocation7], 1
    %9 = vsyncpa %s8, 0
    %10 = vsyncpa [#allocation10], 0
    %s11 = scalar_lea.sflag [#allocation10], 1
    %12 = vsyncpa %s11, 0
    %13 = vsyncpa [#allocation8], 0
    %s14 = scalar_lea.sflag [#allocation8], 1
    %15 = vsyncpa %s14, 0
    loop: start=0, step=1, limit=6
    $region2: #{tpu_custom_call.1} parent=1 // loop_pre_header
      _
    $region3: #{tpu_custom_call.1} parent=1 // loop_header
      %s17 = sphi 0, %s21
      %p18 = scmp.ge.s32.totalorder %s17, 6
      %s24 = sphi 0, %s43
      %s25 = sphi 0, %s39
      %s26 = sphi 0, %s35
      %s27 = sphi 0, %s24
      %s28 = sphi 0, %s25
      %s29 = sphi 0, %s26
      %s30 = sphi 0, %s27
      %s31 = sphi 0, %s28
      %s32 = sphi 0, %s29
      %s52 = sphi 0, %s54
      %s55 = sphi 0, %s52
      %s56 = sphi 0, %s55
      %s72 = sphi 0, %s56
      %s84 = sphi 0, %s86
      %s87 = sphi 0, %s84
      %s88 = sphi 0, %s87
      %s104 = sphi 0, %s88
      %s112 = sphi 0, %s114
      %s115 = sphi 0, %s112
      %s116 = sphi 0, %s115
      %s132 = sphi 0, %s116
    $region4: #{tpu_custom_call.1} parent=1 // loop_header_branch
      %20 = sbr.rel (%p18) target = $region8
    $region5: #{tpu_custom_call.1} parent=1 // loop_body
      %s22 = ssub.s32 %s17, 1
      %s23 = ssub.s32 %s17, 2
      %s33 = sadd.s32 1, %s26
      %p34 = scmp.ge.s32.totalorder %s33, 2
      %s35 = scalar_select %p34, 0, %s33
      %s36 = sadd.s32 1, %s25
      %s37 = scalar_select %p34, %s36, %s25
      %p38 = scmp.ge.s32.totalorder %s37, 2
      %s39 = scalar_select %p38, 0, %s37
      %s40 = sadd.s32 1, %s24
      %s41 = scalar_select %p38, %s40, %s24
      %p42 = scmp.ge.s32.totalorder %s41, 1
      %s43 = scalar_select %p42, 0, %s41
      %s44 = smul.u32 %s24, 2
      %s45 = sadd.s32 %s44, %s26
      %s46 = smul.u32 %s43, 2
      %s47 = sadd.s32 %s46, %s35
      %s48 = ssub.s32 %s25, %s39
      %s49 = ssub.s32 %s45, %s47
      %s50 = sor.u32 %s48, %s49
      %p51 = scmp.eq.s32.totalorder %s50, 0
      %s53 = sadd.s32 %s52, 1
      %s54 = scalar_select %p51, %s52, %s53
      %p57 = pneg %p51
      %p58 = scmp.eq.s32.totalorder %s17, 3
      %p59 = por %p57, %p58
      %p60 = scmp.ne.s32.totalorder %s52, %s55
      %p61 = scmp.eq.s32.totalorder %s17, 0
      %p62 = por %p60, %p61
      %p63 = scmp.ne.s32.totalorder %s52, %s55
      %p64 = scmp.eq.s32.totalorder %s22, 3
      %p65 = por %p63, %p64
      %p66 = scmp.ne.s32.totalorder %s55, %s56
      %p67 = scmp.eq.s32.totalorder %s22, 0
      %p68 = por %p66, %p67
      %p69 = scmp.ne.s32.totalorder %s55, %s56
      %p70 = scmp.eq.s32.totalorder %s23, 3
      %p71 = por %p69, %p70
      %p73 = scmp.ne.s32.totalorder %s56, %s72
      %p74 = scmp.eq.s32.totalorder %s23, 0
      %p75 = por %p73, %p74
      %s76 = smul.u32 %s24, 2
      %s77 = sadd.s32 %s76, %s26
      %s78 = smul.u32 %s43, 2
      %s79 = sadd.s32 %s78, %s35
      %s80 = ssub.s32 %s25, %s39
      %s81 = ssub.s32 %s77, %s79
      %s82 = sor.u32 %s80, %s81
      %p83 = scmp.eq.s32.totalorder %s82, 0
      %s85 = sadd.s32 %s84, 1
      %s86 = scalar_select %p83, %s84, %s85
      %p89 = pneg %p83
      %p90 = scmp.eq.s32.totalorder %s17, 3
      %p91 = por %p89, %p90
      %p92 = scmp.ne.s32.totalorder %s84, %s87
      %p93 = scmp.eq.s32.totalorder %s17, 0
      %p94 = por %p92, %p93
      %p95 = scmp.ne.s32.totalorder %s84, %s87
      %p96 = scmp.eq.s32.totalorder %s22, 3
      %p97 = por %p95, %p96
      %p98 = scmp.ne.s32.totalorder %s87, %s88
      %p99 = scmp.eq.s32.totalorder %s22, 0
      %p100 = por %p98, %p99
      %p101 = scmp.ne.s32.totalorder %s87, %s88
      %p102 = scmp.eq.s32.totalorder %s23, 3
      %p103 = por %p101, %p102
      %p105 = scmp.ne.s32.totalorder %s88, %s104
      %p106 = scmp.eq.s32.totalorder %s23, 0
      %p107 = por %p105, %p106
      %s108 = sadd.s32 %s25, %s24
      %s109 = sadd.s32 %s39, %s43
      %s110 = ssub.s32 %s108, %s109
      %p111 = scmp.eq.s32.totalorder %s110, 0
      %s113 = sadd.s32 %s112, 1
      %s114 = scalar_select %p111, %s112, %s113
      %p117 = pneg %p111
      %p118 = scmp.eq.s32.totalorder %s17, 3
      %p119 = por %p117, %p118
      %p120 = scmp.ne.s32.totalorder %s112, %s115
      %p121 = scmp.eq.s32.totalorder %s17, 0
      %p122 = por %p120, %p121
      %p123 = scmp.ne.s32.totalorder %s112, %s115
      %p124 = scmp.eq.s32.totalorder %s22, 3
      %p125 = por %p123, %p124
      %p126 = scmp.ne.s32.totalorder %s115, %s116
      %p127 = scmp.eq.s32.totalorder %s22, 0
      %p128 = por %p126, %p127
      %p129 = scmp.ne.s32.totalorder %s115, %s116
      %p130 = scmp.eq.s32.totalorder %s23, 3
      %p131 = por %p129, %p130
      %p133 = scmp.ne.s32.totalorder %s116, %s132
      %p134 = scmp.eq.s32.totalorder %s23, 0
      %p135 = por %p133, %p134
      %p136 = scmp.le.s32.totalorder 1, %s17
      %p137 = scmp.lt.s32.totalorder %s17, 5
      %p138 = pnand %p136, %p137
      %p139 = pneg %p138
      // Predicated region
      $region9: #{tpu_custom_call.1} parent=5 // pred_check
        _
      $region10: #{tpu_custom_call.1} parent=5 // pred_check_branch
        %141 = sbr.rel (%p138) target = $region12
      $region11: #{tpu_custom_call.1} parent=5 // pred_region
        %s142 = ssub.s32 %s17, 1
      $region12: #{tpu_custom_call.1} parent=5 // pred_fallthru
        _
      %p143 = scmp.lt.s32.totalorder %s17, 4
      // Predicated region
      $region13: #{tpu_custom_call.1} parent=5 // pred_check
        %p144 = pneg %p143
      $region14: #{tpu_custom_call.1} parent=5 // pred_check_branch
        %146 = sbr.rel (%p144) target = $region16
      $region15: #{tpu_custom_call.1} parent=5 // pred_region
        // Predicated region
        $region17: #{tpu_custom_call.1} parent=15 // pred_check
          %p147 = pneg %p62
        $region18: #{tpu_custom_call.1} parent=15 // pred_check_branch
          %149 = sbr.rel (%p147) target = $region20
        $region19: #{tpu_custom_call.1} parent=15 // pred_region
          %s150 = sand.u32 %s52, 1
          %s151 = scalar_lea.sflag [#allocation7], %s150
          %s152 = sand.u32 %s52, 1
          %s153 = smul.addr %s152, 8
          %s154 = scalar_lea.vmem [#allocation6], %s153
          %s155 = smul.u32 %s24, 2
          %s156 = sadd.s32 %s155, %s26
          %s158 = ssub.s32 128, 128
          %159 = vsyncadd %s151, %s158
          %s160 = smul.addr %s25, 2
          %s161 = sadd.s32 %s156, %s160
          %s162 = smul.addr %s161, 128
          %s163 = scalar_lea.hbm %s0, %s162
          %s165 = sshll.u32 %s154, 4
          %s166 = int_to_ptr.vmem [resolvable:$true] %s165
          %168 = dma.hbm_to_vmem [thread:$0]  %s163, 128, %s166, %s151
        $region20: #{tpu_custom_call.1} parent=15 // pred_fallthru
          _
        // Predicated region
        $region21: #{tpu_custom_call.1} parent=15 // pred_check
          %p169 = pneg %p94
        $region22: #{tpu_custom_call.1} parent=15 // pred_check_branch
          %171 = sbr.rel (%p169) target = $region24
        $region23: #{tpu_custom_call.1} parent=15 // pred_region
          %s172 = sand.u32 %s84, 1
          %s173 = scalar_lea.sflag [#allocation10], %s172
          %s174 = sand.u32 %s84, 1
          %s175 = smul.addr %s174, 12
          %s176 = scalar_lea.vmem [#allocation9], %s175
          %s177 = smul.u32 %s24, 2
          %s178 = sadd.s32 %s177, %s26
          %s180 = ssub.s32 192, 192
          %181 = vsyncadd %s173, %s180
          %s182 = smul.addr %s25, 6
          %s183 = sadd.s32 %s178, %s182
          %s184 = smul.addr %s183, 64
          %s185 = scalar_lea.hbm %s1, %s184
          %s186 = sshll.u32 %s176, 4
          %s187 = int_to_ptr.vmem [resolvable:$true] %s186
          %192 = dma.hbm_to_vmem [thread:$0]  %s185, 192, %s187, %s173, 128, 64, 4
        $region24: #{tpu_custom_call.1} parent=15 // pred_fallthru
          _
      $region16: #{tpu_custom_call.1} parent=5 // pred_fallthru
        _
      %p193 = scmp.le.s32.totalorder 1, %s17
      %p194 = scmp.lt.s32.totalorder %s17, 5
      %p195 = pnand %p193, %p194
      %p196 = pneg %p195
      // Predicated region
      $region25: #{tpu_custom_call.1} parent=5 // pred_check
        _
      $region26: #{tpu_custom_call.1} parent=5 // pred_check_branch
        %198 = sbr.rel (%p195) target = $region28
      $region27: #{tpu_custom_call.1} parent=5 // pred_region
        %s199 = ssub.s32 %s17, 1
        %s200 = sand.u32 %s55, 1
        %s201 = scalar_lea.sflag [#allocation7], %s200
        %s202 = sand.u32 %s55, 1
        %s203 = smul.addr %s202, 8
        %s204 = scalar_lea.vmem [#allocation6], %s203
        // Predicated region
        $region29: #{tpu_custom_call.1} parent=27 // pred_check
          %p205 = pneg %p68
        $region30: #{tpu_custom_call.1} parent=27 // pred_check_branch
          %207 = sbr.rel (%p205) target = $region32
        $region31: #{tpu_custom_call.1} parent=27 // pred_region
          %208 = dma.done %s201, 128
        $region32: #{tpu_custom_call.1} parent=27 // pred_fallthru
          _
        %s209 = sand.u32 %s87, 1
        %s210 = scalar_lea.sflag [#allocation10], %s209
        %s211 = sand.u32 %s87, 1
        %s212 = smul.addr %s211, 12
        %s213 = scalar_lea.vmem [#allocation9], %s212
        // Predicated region
        $region33: #{tpu_custom_call.1} parent=27 // pred_check
          %p214 = pneg %p100
        $region34: #{tpu_custom_call.1} parent=27 // pred_check_branch
          %216 = sbr.rel (%p214) target = $region36
        $region35: #{tpu_custom_call.1} parent=27 // pred_region
          %217 = dma.done %s210, 192
        $region36: #{tpu_custom_call.1} parent=27 // pred_fallthru
          _
        %s218 = sand.u32 %s55, 1
        %s219 = scalar_lea.sflag [#allocation7], %s218
        %s220 = sand.u32 %s55, 1
        %s221 = smul.addr %s220, 8
        %s222 = scalar_lea.vmem [#allocation6], %s221
        %p223 = pneg %p68
        %p224 = pneg %p65
        %s225 = sand.u32 %s87, 1
        %s226 = scalar_lea.sflag [#allocation10], %s225
        %s227 = sand.u32 %s87, 1
        %s228 = smul.addr %s227, 12
        %s229 = scalar_lea.vmem [#allocation9], %s228
        %p230 = pneg %p100
        %p231 = pneg %p97
        %p232 = pneg %p128
        %p233 = pneg %p125
        %s234 = sand.u32 %s115, 1
        %s235 = scalar_lea.sflag [#allocation8], %s234
        %s236 = sand.u32 %s115, 1
        %s237 = scalar_lea.vmem [#allocation11], %s236
        %s238 = smul.u32 %s27, 2
        %s239 = sadd.s32 %s238, %s29
        %s240 = smul.u32 %s27, 2
        %s241 = sadd.s32 %s240, %s29
        %s242 = sadd.s32 %s28, %s27
        %v243 = vld [vmem:[%s204] sm:$0xff]
        %v244 = vld [vmem:[%s213] sm:$0xf]
        %v245 = vunpack.c.l.bf16 %v244
        %vm246 = vcmask 1047680
        %247 = vrot.lane.b32.xlu0 %v245, 16
        %v248 = vpop.permute.xlu0 %247
        %v249 = vsel %vm246, %v248, %v245
        %250 = vrot.lane.b32.xlu0 %v249, 16
        %v251 = vpop.permute.xlu0 %250
        %v252 = vsel %vm246, %v251, %v245
        %254 = vrot.lane.b32.xlu0 %v252, 127
        %v255 = vpop.permute.xlu0 %254
        %v257 = vsub.f32 %v245, %v255
        %v258 = vand.u32 2147483647, %v257
        %v259 = vadd.f32 %v258, 0.0
        %v260 = vrot.slane %v245, 1
        %v261 = vsub.f32 %v245, %v260
        %v262 = vand.u32 2147483647, %v261
        %v263 = vadd.f32 %v262, 0.0
        %s264 = scalar_lea.vmem %s213, 4 [#allocation9]
        %v265 = vld [vmem:[%s264] sm:$0xf]
        %v266 = vunpack.c.l.bf16 %v265
        %267 = vrot.lane.b32.xlu0 %v266, 16
        %v268 = vpop.permute.xlu0 %267
        %v269 = vsel %vm246, %v268, %v266
        %270 = vrot.lane.b32.xlu0 %v269, 16
        %v271 = vpop.permute.xlu0 %270
        %v272 = vsel %vm246, %v271, %v266
        %274 = vrot.lane.b32.xlu0 %v272, 127
        %v275 = vpop.permute.xlu0 %274
        %v277 = vsub.f32 %v266, %v275
        %v278 = vand.u32 2147483647, %v277
        %v279 = vadd.f32 %v259, %v278
        %v280 = vrot.slane %v266, 1
        %v281 = vsub.f32 %v266, %v280
        %v282 = vand.u32 2147483647, %v281
        %v283 = vadd.f32 %v263, %v282
        %s284 = scalar_lea.vmem %s213, 8 [#allocation9]
        %v285 = vld [vmem:[%s284] sm:$0xf]
        %v286 = vunpack.c.l.bf16 %v285
        %287 = vrot.lane.b32.xlu0 %v286, 16
        %v288 = vpop.permute.xlu0 %287
        %v289 = vsel %vm246, %v288, %v286
        %290 = vrot.lane.b32.xlu0 %v289, 16
        %v291 = vpop.permute.xlu0 %290
        %v292 = vsel %vm246, %v291, %v286
        %294 = vrot.lane.b32.xlu0 %v292, 127
        %v295 = vpop.permute.xlu0 %294
        %v297 = vsub.f32 %v286, %v295
        %v298 = vand.u32 2147483647, %v297
        %v299 = vadd.f32 %v279, %v298
        %v300 = vrot.slane %v286, 1
        %v301 = vsub.f32 %v286, %v300
        %v302 = vand.u32 2147483647, %v301
        %v303 = vadd.f32 %v283, %v302
        %304 = vrot.lane.b32.xlu0 %v243, 16
        %v305 = vpop.permute.xlu0 %304
        %v306 = vsel %vm246, %v305, %v243
        %307 = vrot.lane.b32.xlu0 %v306, 16
        %v308 = vpop.permute.xlu0 %307
        %v309 = vsel %vm246, %v308, %v243
        %311 = vrot.lane.b32.xlu0 %v309, 127
        %v312 = vpop.permute.xlu0 %311
        %v314 = vsub.f32 %v243, %v312
        %v315 = vrot.slane %v243, 1
        %v316 = vsub.f32 %v243, %v315
        %v317 = vlaneseq
        %v318 = vand.u32 %v317, 127
        %vm319 = vcmp.lt.s32.totalorder %v318, 15
        %v320 = vsel %vm319, 1, 0
        %v321 = vcvt.s32.f32 %v320
        %v322 = vlaneseq
        %v323 = vshrl.u32 %v322, 7
        %s324 = smul.u32 %s27, 2
        %s325 = sadd.s32 %s324, %s29
        %s326 = smul.u32 %s325, 8
        %v327 = vstv %s326
        %v328 = vadd.s32 %v327, %v323
        %vm329 = vcmp.lt.s32.totalorder %v323, 7
        %vm330 = vcmp.lt.s32.totalorder %v328, 15
        %vm331 = vmand %vm329, %vm330
        %v332 = vsel %vm331, 1, 0
        %v333 = vcvt.s32.f32 %v332
        %v334 = vmul.f32 %v299, -0.33333334
        %v335 = vmul.f32 %v334, 1.442695
        %v336 = vpow.pop %v335
        %v337 = vmul.f32 %v336, %v321
        %v338 = vmul.f32 %v303, -0.33333334
        %v339 = vmul.f32 %v338, 1.442695
        %v340 = vpow.pop %v339
        %v341 = vmul.f32 %v340, %v333
        %v342 = vand.u32 2147483647, %v314
        %v343 = vmul.f32 %v342, %v337
        %v344 = vand.u32 2147483647, %v316
        %v345 = vmul.f32 %v344, %v341
        %p346 = scmp.eq.s32.totalorder %s29, 0
        // Predicated region
        $region37: #{tpu_custom_call.1} parent=27 // pred_check
          %p347 = pneg %p346
        $region38: #{tpu_custom_call.1} parent=27 // pred_check_branch
          %349 = sbr.rel (%p347) target = $region40
        $region39: #{tpu_custom_call.1} parent=27 // pred_region
          %vm350 = vcmask 130048
          %351 = vst.msk [vmem:[#allocation2] sm:$0xff] %vm350, 0.0
          %352 = vst.msk [vmem:[#allocation3] sm:$0xff] %vm350, 0.0
        $region40: #{tpu_custom_call.1} parent=27 // pred_fallthru
          _
        %v353 = vld [vmem:[#allocation2] sm:$0xff]
        %v354 = vadd.f32 %v343, 0.0
        %v355 = vadd.f32 %v353, %v354
        %vm356 = vcmask 130048
        %357 = vst.msk [vmem:[#allocation2] sm:$0xff] %vm356, %v355
        %v358 = vld [vmem:[#allocation3] sm:$0xff]
        %v359 = vadd.f32 %v345, 0.0
        %v360 = vadd.f32 %v358, %v359
        %361 = vst.msk [vmem:[#allocation3] sm:$0xff] %vm356, %v360
        %p362 = scmp.gt.s32.totalorder %s29, 0
        // Predicated region
        $region41: #{tpu_custom_call.1} parent=27 // pred_check
          %p363 = pneg %p362
        $region42: #{tpu_custom_call.1} parent=27 // pred_check_branch
          %365 = sbr.rel (%p363) target = $region44
        $region43: #{tpu_custom_call.1} parent=27 // pred_region
          %v366 = vld [vmem:[%s213] sm:$0x1]
          %v367 = vunpack.c.l.bf16 %v366
          %v368 = vld [vmem:[#allocation5] sm:$0x1]
          %v369 = vsub.f32 %v368, %v367
          %v370 = vand.u32 2147483647, %v369
          %v371 = vadd.f32 %v370, 0.0
          %v372 = vld [vmem:[%s264] sm:$0x1]
          %v373 = vunpack.c.l.bf16 %v372
          %v374 = vld [vmem:[#allocation5 + $0x1] sm:$0x1]
          %v375 = vsub.f32 %v374, %v373
          %v376 = vand.u32 2147483647, %v375
          %v377 = vadd.f32 %v371, %v376
          %v378 = vld [vmem:[%s284] sm:$0x1]
          %v379 = vunpack.c.l.bf16 %v378
          %v380 = vld [vmem:[#allocation5 + $0x2] sm:$0x1]
          %v381 = vsub.f32 %v380, %v379
          %v382 = vand.u32 2147483647, %v381
          %v383 = vadd.f32 %v377, %v382
          %v384 = vld [vmem:[#allocation4] sm:$0x1]
          %v385 = vsub.f32 %v384, %v243
          %v386 = vand.u32 2147483647, %v385
          %v387 = vld [vmem:[#allocation3] sm:$0x1]
          %v388 = vmul.f32 %v383, -0.33333334
          %v389 = vmul.f32 %v388, 1.442695
          %v390 = vpow.pop %v389
          %v391 = vmul.f32 %v386, %v390
          %v392 = vadd.f32 %v387, %v391
          %vm393 = vcmask 122880
          %394 = vst.msk [vmem:[#allocation3] sm:$0x1] %vm393, %v392
        $region44: #{tpu_custom_call.1} parent=27 // pred_fallthru
          _
        %vm395 = vcmask 130055
        %396 = vst.msk [vmem:[#allocation4 - $0x7] sm:$0x80] %vm395, %v243
        %v397 = vld [vmem:[%s213] sm:$0x8]
        %v398 = vunpack.c.l.bf16 %v397
        %399 = vst.msk [vmem:[#allocation5 - $0x7] sm:$0x80] %vm395, %v398
        %v400 = vld [vmem:[%s264] sm:$0x8]
        %v401 = vunpack.c.l.bf16 %v400
        %402 = vst.msk [vmem:[#allocation5 - $0x6] sm:$0x80] %vm395, %v401
        %v403 = vld [vmem:[%s284] sm:$0x8]
        %v404 = vunpack.c.l.bf16 %v403
        %405 = vst.msk [vmem:[#allocation5 - $0x5] sm:$0x80] %vm395, %v404
        %p406 = scmp.eq.s32.totalorder %s29, 1
        // Predicated region
        $region45: #{tpu_custom_call.1} parent=27 // pred_check
          %p407 = pneg %p406
        $region46: #{tpu_custom_call.1} parent=27 // pred_check_branch
          %409 = sbr.rel (%p407) target = $region48
        $region47: #{tpu_custom_call.1} parent=27 // pred_region
          %v410 = vld [vmem:[#allocation2] sm:$0xff]
          %v411 = vsel %vm356, %v410, 0.0
          %412 = vadd.xlane.f32.xlu0 %v411
          %v413 = vpop.xlane.xlu0 %412
          %v414 = vrot.slane %v413, 4
          %v415 = vadd.f32 %v413, %v414
          %v416 = vrot.slane %v415, 2
          %v417 = vadd.f32 %v415, %v416
          %v418 = vrot.slane %v417, 1
          %v419 = vadd.f32 %v417, %v418
          %s420 = vtos %v419
          %v421 = vld [vmem:[#allocation3] sm:$0xff]
          %v422 = vsel %vm356, %v421, 0.0
          %423 = vadd.xlane.f32.xlu0 %v422
          %v424 = vpop.xlane.xlu0 %423
          %v425 = vrot.slane %v424, 4
          %v426 = vadd.f32 %v424, %v425
          %v427 = vrot.slane %v426, 2
          %v428 = vadd.f32 %v426, %v427
          %v429 = vrot.slane %v428, 1
          %v430 = vadd.f32 %v428, %v429
          %s431 = vtos %v430
          %vm432 = vcmp.eq.s32.totalorder %v318, 0
          %v433 = vstv %s420
          %v434 = vsel %vm432, %v433, 0.0
          %vm435 = vcmp.eq.s32.totalorder %v318, 1
          %v436 = vstv %s431
          %v437 = vsel %vm435, %v436, 0.0
          %v438 = vadd.f32 %v434, %v437
          %439 = vst [vmem:[%s237] sm:$0x1] %v438
        $region48: #{tpu_custom_call.1} parent=27 // pred_fallthru
          _
        %s440 = sand.u32 %s115, 1
        %s441 = scalar_lea.sflag [#allocation8], %s440
        %s442 = sand.u32 %s115, 1
        %s443 = scalar_lea.vmem [#allocation11], %s442
        // Predicated region
        $region49: #{tpu_custom_call.1} parent=27 // pred_check
          %p444 = pneg %p125
        $region50: #{tpu_custom_call.1} parent=27 // pred_check_branch
          %446 = sbr.rel (%p444) target = $region52
        $region51: #{tpu_custom_call.1} parent=27 // pred_region
          %s447 = sadd.s32 %s28, %s27
          %s449 = ssub.s32 16, 16
          %450 = vsyncadd %s441, %s449
          %s451 = smul.addr %s447, 16
          %s452 = scalar_lea.hbm %s2, %s451
          %s454 = sshll.u32 %s443, 4
          %s455 = int_to_ptr.vmem [resolvable:$true] %s454
          %457 = dma.vmem_to_hbm [thread:$0]  %s455, 16, %s452, %s441
        $region52: #{tpu_custom_call.1} parent=27 // pred_fallthru
          _
      $region28: #{tpu_custom_call.1} parent=5 // pred_fallthru
        _
      %p458 = scmp.le.s32.totalorder 2, %s17
      // Predicated region
      $region53: #{tpu_custom_call.1} parent=5 // pred_check
        %p459 = pneg %p458
      $region54: #{tpu_custom_call.1} parent=5 // pred_check_branch
        %461 = sbr.rel (%p459) target = $region56
      $region55: #{tpu_custom_call.1} parent=5 // pred_region
        %s462 = ssub.s32 %s17, 2
        // Predicated region
        $region57: #{tpu_custom_call.1} parent=55 // pred_check
          %p463 = pneg %p131
        $region58: #{tpu_custom_call.1} parent=55 // pred_check_branch
          %465 = sbr.rel (%p463) target = $region60
        $region59: #{tpu_custom_call.1} parent=55 // pred_region
          %s466 = sand.u32 %s116, 1
          %s467 = scalar_lea.sflag [#allocation8], %s466
          %s468 = sand.u32 %s116, 1
          %s469 = scalar_lea.vmem [#allocation11], %s468
          %470 = dma.done %s467, 16
        $region60: #{tpu_custom_call.1} parent=55 // pred_fallthru
          _
      $region56: #{tpu_custom_call.1} parent=5 // pred_fallthru
        _
    $region6: #{tpu_custom_call.1} parent=1 // loop_footer
      %s21 = sadd.s32 1, %s17
    $region7: #{tpu_custom_call.1} parent=1 // loop_footer_branch
      %16 = sbr.rel target = $region3
    $region8: #{tpu_custom_call.1} parent=1 // loop_exit
      _
    %471 = vsyncpa [#allocation7], 1
    %s472 = scalar_lea.sflag [#allocation7], 1
    %473 = vsyncpa %s472, 1
    %474 = vsyncpa [#allocation10], 1
    %s475 = scalar_lea.sflag [#allocation10], 1
    %476 = vsyncpa %s475, 1
    %477 = vsyncpa [#allocation8], 1
    %s478 = scalar_lea.sflag [#allocation8], 1
    %479 = vsyncpa %s478, 1

</llo_original>
